<compile_context>
chip_gen: v7x
topology: tpu7x:2x2x1
jax: 0.10.0
libtpu: 0.0.40
codegen_flags: <defaults>
</compile_context>

<pallas_src>
import functools

import jax
import jax.numpy as jnp
from jax.experimental import pallas as pl
from jax.experimental.pallas import tpu as pltpu

ELMO_DIM = 1024


def _round_up(x: int, m: int) -> int:
    return ((x + m - 1) // m) * m


def _round_down(x: int, m: int) -> int:
    return (x // m) * m


def ncet_proj_kernel(x_ref, w_ref, b_ref, out_ref, *, use_bf16):
    # x_ref  : (tm, D)   f32 ELMo activations tile
    # w_ref  : (D, e1)   f32 projection weight, grid-invariant
    # b_ref  : (1, e1)   f32 bias, grid-invariant
    # out_ref: (tm, e1)  f32 projection tile
    x = x_ref[...]
    w = w_ref[...]
    if use_bf16:
        # In-kernel cast: ELMo stream is DMA'd from HBM as f32 exactly once;
        # the VPU convert is free under the DMA on this mem-bound kernel.
        x = x.astype(jnp.bfloat16)
        w = w.astype(jnp.bfloat16)
    acc = jnp.dot(x, w, preferred_element_type=jnp.float32)
    out_ref[...] = acc + b_ref[...]   # bias add in f32


def ncet_embedding(elmo_embeddings, verb_mask, weight, bias, embed_size,
                   *, tile_m=1024, use_bf16=True):
    """Pallas implementation of NCETEmbedding.forward (ELMo output as input)."""
    B, T, D = elmo_embeddings.shape
    Bm, S, T2 = verb_mask.shape
    assert Bm == B and T2 == T and D == ELMO_DIM

    # ---- verb indicator: trivial reduction, hoisted out of the kernel ----
    verb_ind = jnp.sum(verb_mask.astype(jnp.float32), axis=1)[..., None]

    if embed_size == 1025:
        # Module skips the projection entirely in this case.
        return jnp.concatenate(
            [elmo_embeddings.astype(jnp.float32), verb_ind], axis=-1)

    e1 = embed_size - 1
    assert weight.shape == (D, e1) and bias.shape == (e1,)

    # ---- projection hot path: flatten (B, T) -> M rows, tile for the MXU ----
    M = B * T
    x = elmo_embeddings.reshape(M, D)                 # free reshape, stays f32
    w = weight.astype(jnp.float32)
    b2d = bias.astype(jnp.float32).reshape(1, e1)

    # Row tile: multiple of 8 sublanes (8,128 block constraint), capped at
    # tile_m; big tiles amortize per-step overhead on the HBM-bound stream.
    tm = max(8, _round_down(min(tile_m, _round_up(M, 8)), 8))
    grid = (pl.cdiv(M, tm),)   # ragged last block: Pallas masks the store

    # Per-step VMEM estimate (double-buffered x/out tiles + weight + bias).
    vmem_est = 2 * tm * D * 4 + 2 * tm * e1 * 4 + 2 * D * e1 * 4 + 2 * e1 * 4
    cp_kwargs = dict(dimension_semantics=("parallel",))
    if vmem_est > 16 * 1024 * 1024:     # past the v5e scoped default
        cp_kwargs["vmem_limit_bytes"] = min(int(vmem_est * 1.25), 64 * 1024 * 1024)

    proj = pl.pallas_call(
        functools.partial(ncet_proj_kernel, use_bf16=use_bf16),
        out_shape=jax.ShapeDtypeStruct((M, e1), jnp.float32),
        grid_spec=pltpu.PrefetchScalarGridSpec(
            num_scalar_prefetch=0,
            grid=grid,
            in_specs=[
                pl.BlockSpec((tm, D), lambda i: (i, 0)),
                pl.BlockSpec((D, e1), lambda i: (0, 0)),   # grid-invariant weight
                pl.BlockSpec((1, e1), lambda i: (0, 0)),   # grid-invariant bias
            ],
            out_specs=pl.BlockSpec((tm, e1), lambda i: (i, 0)),
        ),
        compiler_params=pltpu.CompilerParams(**cp_kwargs),
    )(x, w, b2d)

    proj = proj.reshape(B, T, e1)

    # TODO(synk): the width-(embed_size) concat is kept for module-faithful
    # output; downstream consumers that accept (proj, verb_ind) separately can
    # skip this extra (possibly non-lane-aligned) HBM pass.
    return jnp.concatenate([proj, verb_ind], axis=-1)


def reference(elmo_embeddings, verb_mask, weight, bias):
    proj = jnp.einsum("btd,de->bte", elmo_embeddings, weight) + bias
    verb_ind = jnp.sum(verb_mask.astype(jnp.float32), axis=1)[..., None]
    return jnp.concatenate([proj, verb_ind], axis=-1)


if __name__ == "__main__":
    # Small shapes consistent with the module's forward.
    B, S, T = 2, 4, 8           # batch, max_sents, max_tokens
    embed_size = 129            # -> projection dim 128 (lane-dense)
    D = ELMO_DIM
    e1 = embed_size - 1

    key = jax.random.PRNGKey(0)
    k_elmo, k_w, k_mask = jax.random.split(key, 3)

    # Synthetic "ELMo" activations (stand-in for the frozen pretrained model).
    elmo_embeddings = jax.random.normal(k_elmo, (B, T, D), dtype=jnp.float32)

    # Xavier-normal init for the projection weight (d_in=1024, d_out=e1).
    xavier_std = (2.0 / (D + e1)) ** 0.5
    weight = xavier_std * jax.random.normal(k_w, (D, e1), dtype=jnp.float32)
    bias = jnp.zeros((e1,), dtype=jnp.float32)

    # Binary verb mask (batch, max_sents, max_tokens), int32.
    verb_mask = (jax.random.uniform(k_mask, (B, S, T)) > 0.7).astype(jnp.int32)

    ref = reference(elmo_embeddings, verb_mask, weight, bias)

    # bf16-MXU path (default, bandwidth-optimized) — relaxed tolerance.
    out = ncet_embedding(elmo_embeddings, verb_mask, weight, bias, embed_size)
    out = jax.block_until_ready(out)
    assert out.shape == (B, T, embed_size), out.shape
    assert jnp.allclose(out, ref, atol=5e-2, rtol=5e-2), "bf16 path mismatch"

    # f32 path — tight tolerance check of kernel structure.
    out_f32 = ncet_embedding(elmo_embeddings, verb_mask, weight, bias,
                             embed_size, use_bf16=False)
    out_f32 = jax.block_until_ready(out_f32)
    assert jnp.allclose(out_f32, ref, atol=1e-4, rtol=1e-4), "f32 path mismatch"

    # Ragged-M path: M=24 rows with tile_m=16 -> grid of 2 with a masked
    # partial last block (exercises the no-pad code path).
    k_e2, k_m2 = jax.random.split(jax.random.PRNGKey(1), 2)
    elmo2 = jax.random.normal(k_e2, (2, 12, D), dtype=jnp.float32)
    mask2 = (jax.random.uniform(k_m2, (2, S, 12)) > 0.7).astype(jnp.int32)
    ref2 = reference(elmo2, mask2, weight, bias)
    out2 = ncet_embedding(elmo2, mask2, weight, bias, embed_size,
                          tile_m=16, use_bf16=False)
    out2 = jax.block_until_ready(out2)
    assert out2.shape == (2, 12, embed_size), out2.shape
    assert jnp.allclose(out2, ref2, atol=1e-4, rtol=1e-4), "ragged path mismatch"

    print("KERNEL_OK")
</pallas_src>

<mosaic_0001>
module attributes {stable_mosaic.version = 11 : i64} {
  func.func @ncet_proj_kernel(%arg0: i32, %arg1: memref<16x1024xf32, #tpu.memory_space<vmem>>, %arg2: memref<1024x128xf32, #tpu.memory_space<vmem>>, %arg3: memref<1x128xf32, #tpu.memory_space<vmem>>, %arg4: memref<16x128xf32, #tpu.memory_space<vmem>>) attributes {dimension_semantics = [#tpu.dimension_semantics<parallel>], iteration_bounds = array<i64: 1>, scalar_prefetch = 0 : i64, scratch_operands = 0 : i64, tpu.core_type = #tpu.core_type<tc>, window_params = [{transform_indices = @transform_0, window_bounds = array<i64: 16, 1024>}, {pipeline_mode = #tpu.pipeline_mode<synchronous>, transform_indices = @transform_1, window_bounds = array<i64: 1024, 128>}, {pipeline_mode = #tpu.pipeline_mode<synchronous>, transform_indices = @transform_2, window_bounds = array<i64: 1, 128>}, {transform_indices = @transform_3, window_bounds = array<i64: 16, 128>}]} {
    %c0 = arith.constant 0 : index
    %c0_0 = arith.constant 0 : index
    %0 = vector.load %arg1[%c0, %c0_0] : memref<16x1024xf32, #tpu.memory_space<vmem>>, vector<16x1024xf32>
    %c0_1 = arith.constant 0 : index
    %c0_2 = arith.constant 0 : index
    %1 = vector.load %arg2[%c0_1, %c0_2] : memref<1024x128xf32, #tpu.memory_space<vmem>>, vector<1024x128xf32>
    %2 = arith.truncf %0 : vector<16x1024xf32> to vector<16x1024xbf16>
    %3 = arith.truncf %1 : vector<1024x128xf32> to vector<1024x128xbf16>
    %cst = arith.constant dense<0.000000e+00> : vector<16x128xf32>
    %4 = tpu.matmul %2, %3, %cst {dimension_numbers = #tpu.dot_dimension_numbers<[1], [0], [0], [1], [0, 0, 1, 1], [], []>} : vector<16x1024xbf16>, vector<1024x128xbf16>, vector<16x128xf32> -> vector<16x128xf32>
    %c0_3 = arith.constant 0 : index
    %c0_4 = arith.constant 0 : index
    %5 = vector.load %arg3[%c0_3, %c0_4] : memref<1x128xf32, #tpu.memory_space<vmem>>, vector<1x128xf32>
    %6 = vector.broadcast %5 : vector<1x128xf32> to vector<16x128xf32>
    %7 = arith.addf %4, %6 : vector<16x128xf32>
    %c0_5 = arith.constant 0 : index
    %c0_6 = arith.constant 0 : index
    %8 = vector.load %arg4[%c0_5, %c0_6] : memref<16x128xf32, #tpu.memory_space<vmem>>, vector<16x128xf32>
    tpu.vector_store %arg4[%c0_5, %c0_6], %7 {strides = array<i32>} : memref<16x128xf32, #tpu.memory_space<vmem>>, vector<16x128xf32>,
    return
  }
  func.func @transform_0(%arg0: i32) -> (i32, i32) {
    %c0_i32 = arith.constant 0 : i32
    %c0_i32_0 = arith.constant 0 : i32
    return %arg0, %c0_i32 : i32, i32
  }
  func.func @transform_1(%arg0: i32) -> (i32, i32) {
    %c0_i32 = arith.constant 0 : i32
    %c0_i32_0 = arith.constant 0 : i32
    %c0_i32_1 = arith.constant 0 : i32
    return %c0_i32, %c0_i32_0 : i32, i32
  }
  func.func @transform_2(%arg0: i32) -> (i32, i32) {
    %c0_i32 = arith.constant 0 : i32
    %c0_i32_0 = arith.constant 0 : i32
    %c0_i32_1 = arith.constant 0 : i32
    return %c0_i32, %c0_i32_0 : i32, i32
  }
  func.func @transform_3(%arg0: i32) -> (i32, i32) {
    %c0_i32 = arith.constant 0 : i32
    %c0_i32_0 = arith.constant 0 : i32
    return %arg0, %c0_i32 : i32, i32
  }
}

</mosaic_0001>

<llo_original>
// kernel: tpu_custom_call.1
$region0: #{tpu_custom_call.1}
  #allocation0 [shape = 'u32[]', space=smem, size = 0x4, offset = 0x4, fixed_abs, tag = 'smem constant byte address 0x4 - core index']
  #allocation1 [shape = 'u32[144,128]{1,0:T(1,128)}', space=vmem, size = 0x12000, scoped, tag = 'internal scratch']
  %s0 = inlined_call_operand.hbm [shape: f32[16,1024], index: 0, kind: input, shape index: {}]
  %s1 = inlined_call_operand.hbm [shape: f32[1024,128], index: 1, kind: input, shape index: {}]
  %s2 = inlined_call_operand.vmem [shape: f32[1,128], index: 2, kind: input, shape index: {}]
  %s3 = inlined_call_operand.hbm [shape: f32[16,128], index: 3, kind: output, shape index: {}]
  %s4 = sld [smem:[#allocation0]]
  $region30: #{tpu_custom_call.1} parent=0
    _
  %s6 = ssub.s32 1, %s4
  %s7 = scalar_select 0, %s6, %s4
  $region1: #{tpu_custom_call.1} parent=0
    #allocation2 [shape = 'u8[65536]{0}', space=vmem, size = 0x10000, scoped, tag = 'input window, operand 0, single buffered']
    #allocation3 [shape = 's32[1]{0}', space=sflag, size = 0x4, scoped, tag = 'scoped memory for tpu_custom_call.1']
    #allocation4 [shape = 's32[1]{0}', space=sflag, size = 0x4, scoped, tag = 'scoped memory for tpu_custom_call.1']
    #allocation5 [shape = 'u8[524288]{0}', space=vmem, size = 0x80000, scoped, tag = 'input window, operand 1, single buffered']
    #allocation6 [shape = 's32[1]{0}', space=sflag, size = 0x4, scoped, tag = 'scoped memory for tpu_custom_call.1']
    #allocation7 [shape = 'u8[8192]{0}', space=vmem, size = 0x2000, scoped, tag = 'output window, operand 0, single buffered']
    %8 = vsyncpa [#allocation3], 0
    %9 = vsyncpa [#allocation6], 0
    %10 = vsyncpa [#allocation4], 0
    // Predicated region
    $region2: #{tpu_custom_call.1} parent=1 // pred_check
      _
    $region3: #{tpu_custom_call.1} parent=1 // pred_check_branch
      %12 = sbr.rel (0) target = $region5
    $region4: #{tpu_custom_call.1} parent=1 // pred_region
      %s14 = ssub.s32 2048, 2048
      %15 = vsyncadd [#allocation3], %s14
      %s16 = sshll.u32 [#allocation2], 4
      %s17 = int_to_ptr.vmem [resolvable:$true] %s16
      %22 = dma.hbm_to_vmem [thread:$0]  %s0, 2048, %s17, [#allocation3], 1024, 1024, 64
    $region5: #{tpu_custom_call.1} parent=1 // pred_fallthru
      _
    // Predicated region
    $region6: #{tpu_custom_call.1} parent=1 // pred_check
      _
    $region7: #{tpu_custom_call.1} parent=1 // pred_check_branch
      %24 = sbr.rel (0) target = $region9
    $region8: #{tpu_custom_call.1} parent=1 // pred_region
      %s26 = ssub.s32 16384, 16384
      %27 = vsyncadd [#allocation6], %s26
      %s28 = sshll.u32 [#allocation5], 4
      %s29 = int_to_ptr.vmem [resolvable:$true] %s28
      %34 = dma.hbm_to_vmem [thread:$0]  %s1, 16384, %s29, [#allocation6], 128, 128, 8
    $region9: #{tpu_custom_call.1} parent=1 // pred_fallthru
      _
    // Predicated region
    $region10: #{tpu_custom_call.1} parent=1 // pred_check
      _
    $region11: #{tpu_custom_call.1} parent=1 // pred_check_branch
      %36 = sbr.rel (0) target = $region13
    $region12: #{tpu_custom_call.1} parent=1 // pred_region
      _
    $region13: #{tpu_custom_call.1} parent=1 // pred_fallthru
      _
    // Predicated region
    $region14: #{tpu_custom_call.1} parent=1 // pred_check
      _
    $region15: #{tpu_custom_call.1} parent=1 // pred_check_branch
      %38 = sbr.rel (0) target = $region17
    $region16: #{tpu_custom_call.1} parent=1 // pred_region
      %39 = dma.done [#allocation3], 2048
    $region17: #{tpu_custom_call.1} parent=1 // pred_fallthru
      _
    // Predicated region
    $region18: #{tpu_custom_call.1} parent=1 // pred_check
      _
    $region19: #{tpu_custom_call.1} parent=1 // pred_check_branch
      %41 = sbr.rel (0) target = $region21
    $region20: #{tpu_custom_call.1} parent=1 // pred_region
      %42 = dma.done [#allocation6], 16384
    $region21: #{tpu_custom_call.1} parent=1 // pred_fallthru
      _
    %v44 = vld [vmem:[#allocation2] sm:$0xff]
    %v45 = vld [vmem:[#allocation2 + $0x8] sm:$0xff]
    %v46 = vld [vmem:[#allocation2 + $0x10] sm:$0xff]
    %v47 = vld [vmem:[#allocation2 + $0x18] sm:$0xff]
    %v48 = vld [vmem:[#allocation2 + $0x20] sm:$0xff]
    %v49 = vld [vmem:[#allocation2 + $0x28] sm:$0xff]
    %v50 = vld [vmem:[#allocation2 + $0x30] sm:$0xff]
    %v51 = vld [vmem:[#allocation2 + $0x38] sm:$0xff]
    %v52 = vld [vmem:[#allocation2 + $0x40] sm:$0xff]
    %v53 = vld [vmem:[#allocation2 + $0x48] sm:$0xff]
    %v54 = vld [vmem:[#allocation2 + $0x50] sm:$0xff]
    %v55 = vld [vmem:[#allocation2 + $0x58] sm:$0xff]
    %v56 = vld [vmem:[#allocation2 + $0x60] sm:$0xff]
    %v57 = vld [vmem:[#allocation2 + $0x68] sm:$0xff]
    %v58 = vld [vmem:[#allocation2 + $0x70] sm:$0xff]
    %v59 = vld [vmem:[#allocation2 + $0x78] sm:$0xff]
    %v60 = vld [vmem:[#allocation5] sm:$0xff]
    %v61 = vld [vmem:[#allocation5 + $0x8] sm:$0xff]
    %v62 = vld [vmem:[#allocation5 + $0x10] sm:$0xff]
    %v63 = vld [vmem:[#allocation5 + $0x18] sm:$0xff]
    %v64 = vld [vmem:[#allocation5 + $0x20] sm:$0xff]
    %v65 = vld [vmem:[#allocation5 + $0x28] sm:$0xff]
    %v66 = vld [vmem:[#allocation5 + $0x30] sm:$0xff]
    %v67 = vld [vmem:[#allocation5 + $0x38] sm:$0xff]
    %v68 = vld [vmem:[#allocation5 + $0x40] sm:$0xff]
    %v69 = vld [vmem:[#allocation5 + $0x48] sm:$0xff]
    %v70 = vld [vmem:[#allocation5 + $0x50] sm:$0xff]
    %v71 = vld [vmem:[#allocation5 + $0x58] sm:$0xff]
    %v72 = vld [vmem:[#allocation5 + $0x60] sm:$0xff]
    %v73 = vld [vmem:[#allocation5 + $0x68] sm:$0xff]
    %v74 = vld [vmem:[#allocation5 + $0x70] sm:$0xff]
    %v75 = vld [vmem:[#allocation5 + $0x78] sm:$0xff]
    %v76 = vld [vmem:[#allocation5 + $0x80] sm:$0xff]
    %v77 = vld [vmem:[#allocation5 + $0x88] sm:$0xff]
    %v78 = vld [vmem:[#allocation5 + $0x90] sm:$0xff]
    %v79 = vld [vmem:[#allocation5 + $0x98] sm:$0xff]
    %v80 = vld [vmem:[#allocation5 + $0xa0] sm:$0xff]
    %v81 = vld [vmem:[#allocation5 + $0xa8] sm:$0xff]
    %v82 = vld [vmem:[#allocation5 + $0xb0] sm:$0xff]
    %v83 = vld [vmem:[#allocation5 + $0xb8] sm:$0xff]
    %v84 = vld [vmem:[#allocation5 + $0xc0] sm:$0xff]
    %v85 = vld [vmem:[#allocation5 + $0xc8] sm:$0xff]
    %v86 = vld [vmem:[#allocation5 + $0xd0] sm:$0xff]
    %v87 = vld [vmem:[#allocation5 + $0xd8] sm:$0xff]
    %v88 = vld [vmem:[#allocation5 + $0xe0] sm:$0xff]
    %v89 = vld [vmem:[#allocation5 + $0xe8] sm:$0xff]
    %v90 = vld [vmem:[#allocation5 + $0xf0] sm:$0xff]
    %v91 = vld [vmem:[#allocation5 + $0xf8] sm:$0xff]
    %v92 = vld [vmem:[#allocation5 + $0x100] sm:$0xff]
    %v93 = vld [vmem:[#allocation5 + $0x108] sm:$0xff]
    %v94 = vld [vmem:[#allocation5 + $0x110] sm:$0xff]
    %v95 = vld [vmem:[#allocation5 + $0x118] sm:$0xff]
    %v96 = vld [vmem:[#allocation5 + $0x120] sm:$0xff]
    %v97 = vld [vmem:[#allocation5 + $0x128] sm:$0xff]
    %v98 = vld [vmem:[#allocation5 + $0x130] sm:$0xff]
    %v99 = vld [vmem:[#allocation5 + $0x138] sm:$0xff]
    %v100 = vld [vmem:[#allocation5 + $0x140] sm:$0xff]
    %v101 = vld [vmem:[#allocation5 + $0x148] sm:$0xff]
    %v102 = vld [vmem:[#allocation5 + $0x150] sm:$0xff]
    %v103 = vld [vmem:[#allocation5 + $0x158] sm:$0xff]
    %v104 = vld [vmem:[#allocation5 + $0x160] sm:$0xff]
    %v105 = vld [vmem:[#allocation5 + $0x168] sm:$0xff]
    %v106 = vld [vmem:[#allocation5 + $0x170] sm:$0xff]
    %v107 = vld [vmem:[#allocation5 + $0x178] sm:$0xff]
    %v108 = vld [vmem:[#allocation5 + $0x180] sm:$0xff]
    %v109 = vld [vmem:[#allocation5 + $0x188] sm:$0xff]
    %v110 = vld [vmem:[#allocation5 + $0x190] sm:$0xff]
    %v111 = vld [vmem:[#allocation5 + $0x198] sm:$0xff]
    %v112 = vld [vmem:[#allocation5 + $0x1a0] sm:$0xff]
    %v113 = vld [vmem:[#allocation5 + $0x1a8] sm:$0xff]
    %v114 = vld [vmem:[#allocation5 + $0x1b0] sm:$0xff]
    %v115 = vld [vmem:[#allocation5 + $0x1b8] sm:$0xff]
    %v116 = vld [vmem:[#allocation5 + $0x1c0] sm:$0xff]
    %v117 = vld [vmem:[#allocation5 + $0x1c8] sm:$0xff]
    %v118 = vld [vmem:[#allocation5 + $0x1d0] sm:$0xff]
    %v119 = vld [vmem:[#allocation5 + $0x1d8] sm:$0xff]
    %v120 = vld [vmem:[#allocation5 + $0x1e0] sm:$0xff]
    %v121 = vld [vmem:[#allocation5 + $0x1e8] sm:$0xff]
    %v122 = vld [vmem:[#allocation5 + $0x1f0] sm:$0xff]
    %v123 = vld [vmem:[#allocation5 + $0x1f8] sm:$0xff]
    %v124 = vld [vmem:[#allocation5 + $0x200] sm:$0xff]
    %v125 = vld [vmem:[#allocation5 + $0x208] sm:$0xff]
    %v126 = vld [vmem:[#allocation5 + $0x210] sm:$0xff]
    %v127 = vld [vmem:[#allocation5 + $0x218] sm:$0xff]
    %v128 = vld [vmem:[#allocation5 + $0x220] sm:$0xff]
    %v129 = vld [vmem:[#allocation5 + $0x228] sm:$0xff]
    %v130 = vld [vmem:[#allocation5 + $0x230] sm:$0xff]
    %v131 = vld [vmem:[#allocation5 + $0x238] sm:$0xff]
    %v132 = vld [vmem:[#allocation5 + $0x240] sm:$0xff]
    %v133 = vld [vmem:[#allocation5 + $0x248] sm:$0xff]
    %v134 = vld [vmem:[#allocation5 + $0x250] sm:$0xff]
    %v135 = vld [vmem:[#allocation5 + $0x258] sm:$0xff]
    %v136 = vld [vmem:[#allocation5 + $0x260] sm:$0xff]
    %v137 = vld [vmem:[#allocation5 + $0x268] sm:$0xff]
    %v138 = vld [vmem:[#allocation5 + $0x270] sm:$0xff]
    %v139 = vld [vmem:[#allocation5 + $0x278] sm:$0xff]
    %v140 = vld [vmem:[#allocation5 + $0x280] sm:$0xff]
    %v141 = vld [vmem:[#allocation5 + $0x288] sm:$0xff]
    %v142 = vld [vmem:[#allocation5 + $0x290] sm:$0xff]
    %v143 = vld [vmem:[#allocation5 + $0x298] sm:$0xff]
    %v144 = vld [vmem:[#allocation5 + $0x2a0] sm:$0xff]
    %v145 = vld [vmem:[#allocation5 + $0x2a8] sm:$0xff]
    %v146 = vld [vmem:[#allocation5 + $0x2b0] sm:$0xff]
    %v147 = vld [vmem:[#allocation5 + $0x2b8] sm:$0xff]
    %v148 = vld [vmem:[#allocation5 + $0x2c0] sm:$0xff]
    %v149 = vld [vmem:[#allocation5 + $0x2c8] sm:$0xff]
    %v150 = vld [vmem:[#allocation5 + $0x2d0] sm:$0xff]
    %v151 = vld [vmem:[#allocation5 + $0x2d8] sm:$0xff]
    %v152 = vld [vmem:[#allocation5 + $0x2e0] sm:$0xff]
    %v153 = vld [vmem:[#allocation5 + $0x2e8] sm:$0xff]
    %v154 = vld [vmem:[#allocation5 + $0x2f0] sm:$0xff]
    %v155 = vld [vmem:[#allocation5 + $0x2f8] sm:$0xff]
    %v156 = vld [vmem:[#allocation5 + $0x300] sm:$0xff]
    %v157 = vld [vmem:[#allocation5 + $0x308] sm:$0xff]
    %v158 = vld [vmem:[#allocation5 + $0x310] sm:$0xff]
    %v159 = vld [vmem:[#allocation5 + $0x318] sm:$0xff]
    %v160 = vld [vmem:[#allocation5 + $0x320] sm:$0xff]
    %v161 = vld [vmem:[#allocation5 + $0x328] sm:$0xff]
    %v162 = vld [vmem:[#allocation5 + $0x330] sm:$0xff]
    %v163 = vld [vmem:[#allocation5 + $0x338] sm:$0xff]
    %v164 = vld [vmem:[#allocation5 + $0x340] sm:$0xff]
    %v165 = vld [vmem:[#allocation5 + $0x348] sm:$0xff]
    %v166 = vld [vmem:[#allocation5 + $0x350] sm:$0xff]
    %v167 = vld [vmem:[#allocation5 + $0x358] sm:$0xff]
    %v168 = vld [vmem:[#allocation5 + $0x360] sm:$0xff]
    %v169 = vld [vmem:[#allocation5 + $0x368] sm:$0xff]
    %v170 = vld [vmem:[#allocation5 + $0x370] sm:$0xff]
    %v171 = vld [vmem:[#allocation5 + $0x378] sm:$0xff]
    %v172 = vld [vmem:[#allocation5 + $0x380] sm:$0xff]
    %v173 = vld [vmem:[#allocation5 + $0x388] sm:$0xff]
    %v174 = vld [vmem:[#allocation5 + $0x390] sm:$0xff]
    %v175 = vld [vmem:[#allocation5 + $0x398] sm:$0xff]
    %v176 = vld [vmem:[#allocation5 + $0x3a0] sm:$0xff]
    %v177 = vld [vmem:[#allocation5 + $0x3a8] sm:$0xff]
    %v178 = vld [vmem:[#allocation5 + $0x3b0] sm:$0xff]
    %v179 = vld [vmem:[#allocation5 + $0x3b8] sm:$0xff]
    %v180 = vld [vmem:[#allocation5 + $0x3c0] sm:$0xff]
    %v181 = vld [vmem:[#allocation5 + $0x3c8] sm:$0xff]
    %v182 = vld [vmem:[#allocation5 + $0x3d0] sm:$0xff]
    %v183 = vld [vmem:[#allocation5 + $0x3d8] sm:$0xff]
    %v184 = vld [vmem:[#allocation5 + $0x3e0] sm:$0xff]
    %v185 = vld [vmem:[#allocation5 + $0x3e8] sm:$0xff]
    %v186 = vld [vmem:[#allocation5 + $0x3f0] sm:$0xff]
    %v187 = vld [vmem:[#allocation5 + $0x3f8] sm:$0xff]
    %v188 = vpack.c.bf16 %v52, %v44
    %v189 = vpack.c.bf16 %v53, %v45
    %v190 = vpack.c.bf16 %v54, %v46
    %v191 = vpack.c.bf16 %v55, %v47
    %v192 = vpack.c.bf16 %v56, %v48
    %v193 = vpack.c.bf16 %v57, %v49
    %v194 = vpack.c.bf16 %v58, %v50
    %v195 = vpack.c.bf16 %v59, %v51
    %v196 = vpack.c.bf16 %v61, %v60
    %v197 = vpack.c.bf16 %v63, %v62
    %v198 = vpack.c.bf16 %v65, %v64
    %v199 = vpack.c.bf16 %v67, %v66
    %v200 = vpack.c.bf16 %v69, %v68
    %v201 = vpack.c.bf16 %v71, %v70
    %v202 = vpack.c.bf16 %v73, %v72
    %v203 = vpack.c.bf16 %v75, %v74
    %v204 = vpack.c.bf16 %v77, %v76
    %v205 = vpack.c.bf16 %v79, %v78
    %v206 = vpack.c.bf16 %v81, %v80
    %v207 = vpack.c.bf16 %v83, %v82
    %v208 = vpack.c.bf16 %v85, %v84
    %v209 = vpack.c.bf16 %v87, %v86
    %v210 = vpack.c.bf16 %v89, %v88
    %v211 = vpack.c.bf16 %v91, %v90
    %v212 = vpack.c.bf16 %v93, %v92
    %v213 = vpack.c.bf16 %v95, %v94
    %v214 = vpack.c.bf16 %v97, %v96
    %v215 = vpack.c.bf16 %v99, %v98
    %v216 = vpack.c.bf16 %v101, %v100
    %v217 = vpack.c.bf16 %v103, %v102
    %v218 = vpack.c.bf16 %v105, %v104
    %v219 = vpack.c.bf16 %v107, %v106
    %v220 = vpack.c.bf16 %v109, %v108
    %v221 = vpack.c.bf16 %v111, %v110
    %v222 = vpack.c.bf16 %v113, %v112
    %v223 = vpack.c.bf16 %v115, %v114
    %v224 = vpack.c.bf16 %v117, %v116
    %v225 = vpack.c.bf16 %v119, %v118
    %v226 = vpack.c.bf16 %v121, %v120
    %v227 = vpack.c.bf16 %v123, %v122
    %v228 = vpack.c.bf16 %v125, %v124
    %v229 = vpack.c.bf16 %v127, %v126
    %v230 = vpack.c.bf16 %v129, %v128
    %v231 = vpack.c.bf16 %v131, %v130
    %v232 = vpack.c.bf16 %v133, %v132
    %v233 = vpack.c.bf16 %v135, %v134
    %v234 = vpack.c.bf16 %v137, %v136
    %v235 = vpack.c.bf16 %v139, %v138
    %v236 = vpack.c.bf16 %v141, %v140
    %v237 = vpack.c.bf16 %v143, %v142
    %v238 = vpack.c.bf16 %v145, %v144
    %v239 = vpack.c.bf16 %v147, %v146
    %v240 = vpack.c.bf16 %v149, %v148
    %v241 = vpack.c.bf16 %v151, %v150
    %v242 = vpack.c.bf16 %v153, %v152
    %v243 = vpack.c.bf16 %v155, %v154
    %v244 = vpack.c.bf16 %v157, %v156
    %v245 = vpack.c.bf16 %v159, %v158
    %v246 = vpack.c.bf16 %v161, %v160
    %v247 = vpack.c.bf16 %v163, %v162
    %v248 = vpack.c.bf16 %v165, %v164
    %v249 = vpack.c.bf16 %v167, %v166
    %v250 = vpack.c.bf16 %v169, %v168
    %v251 = vpack.c.bf16 %v171, %v170
    %v252 = vpack.c.bf16 %v173, %v172
    %v253 = vpack.c.bf16 %v175, %v174
    %v254 = vpack.c.bf16 %v177, %v176
    %v255 = vpack.c.bf16 %v179, %v178
    %v256 = vpack.c.bf16 %v181, %v180
    %v257 = vpack.c.bf16 %v183, %v182
    %v258 = vpack.c.bf16 %v185, %v184
    %v259 = vpack.c.bf16 %v187, %v186
    %v260 = vld [vmem:[%s2] sm:$0x1]
    %v262 = vlaneseq
    %v263 = vshrl.u32 %v262, 7
    %v264 = vsub.s32 0, %v263
    %v265 = vrot.slane %v260, %v264
    %267 = vmatprep.subr.bf16.mxu0 0
    %268 = vmatpush1.bf16.msra.mxu0 %v196
    %269 = vmatprep.subr.bf16.mxu0 0
    %270 = vmatpush1.bf16.msra.mxu0 %v197
    %271 = vmatprep.subr.bf16.mxu0 0
    %272 = vmatpush1.bf16.msra.mxu0 %v198
    %273 = vmatprep.subr.bf16.mxu0 0
    %274 = vmatpush1.bf16.msra.mxu0 %v199
    %275 = vmatprep.subr.bf16.mxu0 0
    %276 = vmatpush1.bf16.msra.mxu0 %v200
    %277 = vmatprep.subr.bf16.mxu0 0
    %278 = vmatpush1.bf16.msra.mxu0 %v201
    %279 = vmatprep.subr.bf16.mxu0 0
    %280 = vmatpush1.bf16.msra.mxu0 %v202
    %281 = vmatprep.subr.bf16.mxu0 0
    %282 = vmatpush1.bf16.msra.mxu0 %v203
    %283 = vmatprep.subr.bf16.mxu0 0
    %284 = vmatpush1.bf16.msra.mxu0 %v204
    %285 = vmatprep.subr.bf16.mxu0 0
    %286 = vmatpush1.bf16.msra.mxu0 %v205
    %287 = vmatprep.subr.bf16.mxu0 0
    %288 = vmatpush1.bf16.msra.mxu0 %v206
    %289 = vmatprep.subr.bf16.mxu0 0
    %290 = vmatpush1.bf16.msra.mxu0 %v207
    %291 = vmatprep.subr.bf16.mxu0 0
    %292 = vmatpush1.bf16.msra.mxu0 %v208
    %293 = vmatprep.subr.bf16.mxu0 0
    %294 = vmatpush1.bf16.msra.mxu0 %v209
    %295 = vmatprep.subr.bf16.mxu0 0
    %296 = vmatpush1.bf16.msra.mxu0 %v210
    %297 = vmatprep.subr.bf16.mxu0 0
    %298 = vmatpush1.bf16.msra.mxu0 %v211
    %299 = vmatprep.mubr.bf16.mxu0 %v189
    %300 = vmatmul.mubr.bf16.gmra.mrb[0].mxu0 %v188
    %v301 = vpop.f32.mrb[0].mxu0
    %v302 = vadd.f32 %v265, %v301
    %v303 = vpop.f32.mrb[0].mxu0
    %v304 = vpop.f32.mrb[0].mxu0
    %v305 = vadd.f32 %v265, %v304
    %v306 = vpop.f32.mrb[0].mxu0
    %307 = vdwg.mxu0
    %308 = vmatprep.subr.bf16.mxu0 0
    %309 = vmatpush1.bf16.msra.mxu0 %v212
    %310 = vmatprep.subr.bf16.mxu0 0
    %311 = vmatpush1.bf16.msra.mxu0 %v213
    %312 = vmatprep.subr.bf16.mxu0 0
    %313 = vmatpush1.bf16.msra.mxu0 %v214
    %314 = vmatprep.subr.bf16.mxu0 0
    %315 = vmatpush1.bf16.msra.mxu0 %v215
    %316 = vmatprep.subr.bf16.mxu0 0
    %317 = vmatpush1.bf16.msra.mxu0 %v216
    %318 = vmatprep.subr.bf16.mxu0 0
    %319 = vmatpush1.bf16.msra.mxu0 %v217
    %320 = vmatprep.subr.bf16.mxu0 0
    %321 = vmatpush1.bf16.msra.mxu0 %v218
    %322 = vmatprep.subr.bf16.mxu0 0
    %323 = vmatpush1.bf16.msra.mxu0 %v219
    %324 = vmatprep.subr.bf16.mxu0 0
    %325 = vmatpush1.bf16.msra.mxu0 %v220
    %326 = vmatprep.subr.bf16.mxu0 0
    %327 = vmatpush1.bf16.msra.mxu0 %v221
    %328 = vmatprep.subr.bf16.mxu0 0
    %329 = vmatpush1.bf16.msra.mxu0 %v222
    %330 = vmatprep.subr.bf16.mxu0 0
    %331 = vmatpush1.bf16.msra.mxu0 %v223
    %332 = vmatprep.subr.bf16.mxu0 0
    %333 = vmatpush1.bf16.msra.mxu0 %v224
    %334 = vmatprep.subr.bf16.mxu0 0
    %335 = vmatpush1.bf16.msra.mxu0 %v225
    %336 = vmatprep.subr.bf16.mxu0 0
    %337 = vmatpush1.bf16.msra.mxu0 %v226
    %338 = vmatprep.subr.bf16.mxu0 0
    %339 = vmatpush1.bf16.msra.mxu0 %v227
    %340 = vmatprep.mubr.bf16.mxu0 %v191
    %341 = vmatmul.mubr.bf16.gmra.mrb[0].mxu0 %v190
    %v342 = vpop.f32.mrb[0].mxu0
    %v343 = vadd.f32 %v302, %v342
    %v344 = vpop.f32.mrb[0].mxu0
    %v345 = vpop.f32.mrb[0].mxu0
    %v346 = vadd.f32 %v305, %v345
    %v347 = vpop.f32.mrb[0].mxu0
    %348 = vdwg.mxu0
    %349 = vmatprep.subr.bf16.mxu0 0
    %350 = vmatpush1.bf16.msra.mxu0 %v228
    %351 = vmatprep.subr.bf16.mxu0 0
    %352 = vmatpush1.bf16.msra.mxu0 %v229
    %353 = vmatprep.subr.bf16.mxu0 0
    %354 = vmatpush1.bf16.msra.mxu0 %v230
    %355 = vmatprep.subr.bf16.mxu0 0
    %356 = vmatpush1.bf16.msra.mxu0 %v231
    %357 = vmatprep.subr.bf16.mxu0 0
    %358 = vmatpush1.bf16.msra.mxu0 %v232
    %359 = vmatprep.subr.bf16.mxu0 0
    %360 = vmatpush1.bf16.msra.mxu0 %v233
    %361 = vmatprep.subr.bf16.mxu0 0
    %362 = vmatpush1.bf16.msra.mxu0 %v234
    %363 = vmatprep.subr.bf16.mxu0 0
    %364 = vmatpush1.bf16.msra.mxu0 %v235
    %365 = vmatprep.subr.bf16.mxu0 0
    %366 = vmatpush1.bf16.msra.mxu0 %v236
    %367 = vmatprep.subr.bf16.mxu0 0
    %368 = vmatpush1.bf16.msra.mxu0 %v237
    %369 = vmatprep.subr.bf16.mxu0 0
    %370 = vmatpush1.bf16.msra.mxu0 %v238
    %371 = vmatprep.subr.bf16.mxu0 0
    %372 = vmatpush1.bf16.msra.mxu0 %v239
    %373 = vmatprep.subr.bf16.mxu0 0
    %374 = vmatpush1.bf16.msra.mxu0 %v240
    %375 = vmatprep.subr.bf16.mxu0 0
    %376 = vmatpush1.bf16.msra.mxu0 %v241
    %377 = vmatprep.subr.bf16.mxu0 0
    %378 = vmatpush1.bf16.msra.mxu0 %v242
    %379 = vmatprep.subr.bf16.mxu0 0
    %380 = vmatpush1.bf16.msra.mxu0 %v243
    %381 = vmatprep.mubr.bf16.mxu0 %v193
    %382 = vmatmul.mubr.bf16.gmra.mrb[0].mxu0 %v192
    %v383 = vpop.f32.mrb[0].mxu0
    %v384 = vadd.f32 %v343, %v383
    %v385 = vpop.f32.mrb[0].mxu0
    %v386 = vpop.f32.mrb[0].mxu0
    %v387 = vadd.f32 %v346, %v386
    %v388 = vpop.f32.mrb[0].mxu0
    %389 = vdwg.mxu0
    %390 = vmatprep.subr.bf16.mxu0 0
    %391 = vmatpush1.bf16.msra.mxu0 %v244
    %392 = vmatprep.subr.bf16.mxu0 0
    %393 = vmatpush1.bf16.msra.mxu0 %v245
    %394 = vmatprep.subr.bf16.mxu0 0
    %395 = vmatpush1.bf16.msra.mxu0 %v246
    %396 = vmatprep.subr.bf16.mxu0 0
    %397 = vmatpush1.bf16.msra.mxu0 %v247
    %398 = vmatprep.subr.bf16.mxu0 0
    %399 = vmatpush1.bf16.msra.mxu0 %v248
    %400 = vmatprep.subr.bf16.mxu0 0
    %401 = vmatpush1.bf16.msra.mxu0 %v249
    %402 = vmatprep.subr.bf16.mxu0 0
    %403 = vmatpush1.bf16.msra.mxu0 %v250
    %404 = vmatprep.subr.bf16.mxu0 0
    %405 = vmatpush1.bf16.msra.mxu0 %v251
    %406 = vmatprep.subr.bf16.mxu0 0
    %407 = vmatpush1.bf16.msra.mxu0 %v252
    %408 = vmatprep.subr.bf16.mxu0 0
    %409 = vmatpush1.bf16.msra.mxu0 %v253
    %410 = vmatprep.subr.bf16.mxu0 0
    %411 = vmatpush1.bf16.msra.mxu0 %v254
    %412 = vmatprep.subr.bf16.mxu0 0
    %413 = vmatpush1.bf16.msra.mxu0 %v255
    %414 = vmatprep.subr.bf16.mxu0 0
    %415 = vmatpush1.bf16.msra.mxu0 %v256
    %416 = vmatprep.subr.bf16.mxu0 0
    %417 = vmatpush1.bf16.msra.mxu0 %v257
    %418 = vmatprep.subr.bf16.mxu0 0
    %419 = vmatpush1.bf16.msra.mxu0 %v258
    %420 = vmatprep.subr.bf16.mxu0 0
    %421 = vmatpush1.bf16.msra.mxu0 %v259
    %422 = vmatprep.mubr.bf16.mxu0 %v195
    %423 = vmatmul.mubr.bf16.gmra.mrb[0].mxu0 %v194
    %v424 = vpop.f32.mrb[0].mxu0
    %v425 = vadd.f32 %v384, %v424
    %v426 = vpop.f32.mrb[0].mxu0
    %v427 = vpop.f32.mrb[0].mxu0
    %v428 = vadd.f32 %v387, %v427
    %v429 = vpop.f32.mrb[0].mxu0
    %430 = vdwg.mxu0
    %431 = vst [vmem:[#allocation7] sm:$0xff] %v425
    %432 = vst [vmem:[#allocation7 + $0x8] sm:$0xff] %v428
    // Predicated region
    $region22: #{tpu_custom_call.1} parent=1 // pred_check
      _
    $region23: #{tpu_custom_call.1} parent=1 // pred_check_branch
      %434 = sbr.rel (0) target = $region25
    $region24: #{tpu_custom_call.1} parent=1 // pred_region
      %s436 = ssub.s32 256, 256
      %437 = vsyncadd [#allocation4], %s436
      %s438 = sshll.u32 [#allocation7], 4
      %s439 = int_to_ptr.vmem [resolvable:$true] %s438
      %444 = dma.vmem_to_hbm [thread:$0]  %s439, 256, %s3, [#allocation4], 128, 128, 8
    $region25: #{tpu_custom_call.1} parent=1 // pred_fallthru
      _
    // Predicated region
    $region26: #{tpu_custom_call.1} parent=1 // pred_check
      _
    $region27: #{tpu_custom_call.1} parent=1 // pred_check_branch
      %446 = sbr.rel (0) target = $region29
    $region28: #{tpu_custom_call.1} parent=1 // pred_region
      %447 = dma.done [#allocation4], 256
    $region29: #{tpu_custom_call.1} parent=1 // pred_fallthru
      _
    %448 = vsyncpa [#allocation3], 1
    %449 = vsyncpa [#allocation6], 1
    %450 = vsyncpa [#allocation4], 1

</llo_original>
